<compile_context>
chip_gen: v7x
topology: tpu7x:2x2x1
jax: 0.10.0
libtpu: 0.0.40
codegen_flags: <defaults>
</compile_context>

<pallas_src>
import functools

import jax
import jax.numpy as jnp
from jax.experimental import pallas as pl
from jax.experimental.pallas import tpu as pltpu


def _focal_kernel(logits_ref, tgt_ref, cw_ref, loss_ref, cnt_ref, *,
                  gamma, ignore_index):
    j = pl.program_id(2)

    @pl.when(j == 0)
    def _():
        loss_ref[...] = jnp.zeros_like(loss_ref)
        cnt_ref[...] = jnp.zeros_like(cnt_ref)

    x = logits_ref[...].astype(jnp.float32)            # (C, T) classes x pixels
    t = tgt_ref[...]                                   # (1, T) int32

    valid = t != ignore_index                          # (1, T) bool
    # Mask BEFORE max/exp: ragged last tiles / phantom tiles hold unspecified
    # lanes (possibly Inf/NaN); their padded targets are ignore_index.
    x = jnp.where(valid, x, 0.0)

    # numerically-stable log-sum-exp over the class (sublane) axis
    m = jnp.max(x, axis=0, keepdims=True)              # (1, T)
    z = x - m                                          # (C, T)
    ez = jnp.exp(z)                                    # only full-tile EUP op
    sumexp = jnp.sum(ez, axis=0, keepdims=True)        # (1, T)
    lse = jnp.log(sumexp)                              # (1, T)

    # one-hot "gather" of the target class along sublanes
    cls = jax.lax.broadcasted_iota(jnp.int32, x.shape, 0)       # (C, T)
    onehot = (cls == t).astype(jnp.float32)                     # broadcast (1,T)

    z_t = jnp.sum(z * onehot, axis=0, keepdims=True)            # (1, T)
    e_t = jnp.sum(ez * onehot, axis=0, keepdims=True)           # exp(z_target)
    w_t = jnp.sum(cw_ref[...] * onehot, axis=0, keepdims=True)  # class weight

    ce = lse - z_t                         # -log p_target
    p_t = e_t / sumexp                     # p_target, reuses exp(z) (no 2nd exp)
    omp = 1.0 - p_t
    if gamma == 0.0:
        focal_t = jnp.ones_like(omp)
    elif gamma == 1.0:
        focal_t = omp
    elif gamma == 2.0:
        focal_t = omp * omp
    else:  # generic non-integer gamma via exp/log on the EUP (omp >= 0)
        focal_t = jnp.where(omp > 0.0,
                            jnp.exp(gamma * jnp.log(jnp.maximum(omp, 1e-30))),
                            0.0)

    validf = valid.astype(jnp.float32)
    # lane-wise partial sums into the resident per-(batch, split) output block
    loss_ref[...] += w_t * focal_t * ce * validf
    cnt_ref[...] += validf


def _pick_tile_hw(C, itemsize, HW, tile_hw=None):
    hw_ceil = ((HW + 127) // 128) * 128
    if tile_hw is None:
        # aim for ~4 MiB of logits per block; clamp lanes to [1024, 65536]
        t = (4 * 1024 * 1024) // max(1, C * itemsize)
        t = max(1024, min(t, 65536))
    else:
        t = int(tile_hw)
    t = max(128, (t // 128) * 128)
    t = min(t, hw_ceil)
    if HW >= 128:
        # keep every block's *start* inside the logits array; only the last
        # block may be ragged (its garbage lanes are masked in-kernel)
        t = min(t, (HW // 128) * 128)
    return t


def focal_loss(logits_nchw, target_nhw, class_weights=None,
               ignore_index=255, gamma=1.0, tile_hw=None):
    """Mean focal loss over non-ignored pixels (PyTorch FocalLoss.forward).

    logits_nchw: (N, C, H, W) float32 or bfloat16 (kept in its HBM dtype,
                 upcast to f32 inside VMEM).
    target_nhw : (N, H, W) integer class indices.
    Returns NaN if every pixel is ignored (matches torch .mean() of empty).
    """
    N, C, H, W = logits_nchw.shape
    HW = H * W

    # (N, C, H, W) -> (N, C, H*W): trailing-dim collapse, no transpose / copy.
    logits = logits_nchw.reshape(N, C, HW)
    target = target_nhw.reshape(N, 1, HW).astype(jnp.int32)

    if class_weights is None:
        cw = jnp.ones((C, 1), jnp.float32)
    else:
        cw = jnp.asarray(class_weights, jnp.float32).reshape(C, 1)

    itemsize = jnp.dtype(logits.dtype).itemsize
    t_hw = _pick_tile_hw(C, itemsize, HW, tile_hw)

    if HW < 128:
        # pathological tiny spatial extent: pad logits to one lane tile
        # (negligible copy) so the single block stays in bounds.
        logits = jnp.pad(logits, ((0, 0), (0, 0), (0, 128 - HW)))

    n_tiles = pl.cdiv(HW, t_hw)                 # pixel tiles per batch row
    max_blk = n_tiles - 1                       # last in-bounds logits block
    # extra "parallel" split so v7x's 2nd TensorCore is busy when N == 1
    S = 2 if (N < 2 and n_tiles >= 2) else 1
    n_j = pl.cdiv(n_tiles, S)

    # Pad ONLY the tiny int32 target (with ignore_index) so every grid step --
    # including the ragged last tile and any phantom tiles of the S-split --
    # sees an in-bounds target block; invalid lanes then mask themselves.
    hw_tpad = S * n_j * t_hw
    if hw_tpad > HW:
        target = jnp.pad(target, ((0, 0), (0, 0), (0, hw_tpad - HW)),
                         constant_values=ignore_index)

    grid = (N, S, n_j)

    kernel = functools.partial(_focal_kernel, gamma=float(gamma),
                               ignore_index=int(ignore_index))

    cost = pl.CostEstimate(
        flops=int(N * HW * (6 * C + 12)),
        transcendentals=int(N * HW * (C + 3)),
        bytes_accessed=int(logits.size * itemsize + target.size * 4
                           + cw.size * 4 + 2 * N * S * t_hw * 4),
    )

    loss_part, cnt_part = pl.pallas_call(
        kernel,
        out_shape=(jax.ShapeDtypeStruct((N, S, 1, t_hw), jnp.float32),
                   jax.ShapeDtypeStruct((N, S, 1, t_hw), jnp.float32)),
        grid_spec=pltpu.PrefetchScalarGridSpec(
            num_scalar_prefetch=0,
            grid=grid,
            in_specs=[
                # logits: clamp the block index so phantom tiles of the S-split
                # stay in bounds (their contribution is zeroed via the target).
                pl.BlockSpec(
                    (None, C, t_hw),
                    lambda n, s, j: (n, 0, jnp.minimum(s * n_j + j, max_blk))),
                pl.BlockSpec((None, 1, t_hw),
                             lambda n, s, j: (n, 0, s * n_j + j)),
                pl.BlockSpec((C, 1), lambda n, s, j: (0, 0)),
            ],
            out_specs=[
                pl.BlockSpec((None, None, 1, t_hw),
                             lambda n, s, j: (n, s, 0, 0)),
                pl.BlockSpec((None, None, 1, t_hw),
                             lambda n, s, j: (n, s, 0, 0)),
            ],
        ),
        compiler_params=pltpu.CompilerParams(
            dimension_semantics=("parallel", "parallel", "arbitrary")),
        cost_estimate=cost,
    )(logits, target, cw)

    # tiny final reduction of lane-wise partial sums; mean over valid pixels
    return jnp.sum(loss_part) / jnp.sum(cnt_part)


def _reference(logits_nchw, target_nhw, class_weights, ignore_index, gamma):
    N, C, H, W = logits_nchw.shape
    x = jnp.transpose(logits_nchw, (0, 2, 3, 1)).reshape(-1, C)
    t = target_nhw.reshape(-1)
    mask = t != ignore_index
    lp = jax.nn.log_softmax(x, axis=1)
    p = jnp.exp(lp)
    focal = (1.0 - p) ** gamma
    t_safe = jnp.where(mask, t, 0)
    tlp = jnp.take_along_axis(lp, t_safe[:, None], axis=1)[:, 0]
    tff = jnp.take_along_axis(focal, t_safe[:, None], axis=1)[:, 0]
    w = class_weights[t_safe]
    loss = w * tff * (-tlp)
    return jnp.sum(jnp.where(mask, loss, 0.0)) / jnp.sum(mask)


if __name__ == "__main__":
    key = jax.random.PRNGKey(0)
    k1, k2, k3, k4, k5, k6, k7 = jax.random.split(key, 7)

    # --- test 1: f32, class weights, gamma=1, ignored pixels, N=2 ---
    N, C, H, W = 2, 4, 16, 16
    logits = jax.random.normal(k1, (N, C, H, W), jnp.float32)
    target = jax.random.randint(k2, (N, H, W), 0, C).astype(jnp.int32)
    target = jnp.where(jax.random.uniform(k3, (N, H, W)) < 0.1, 255, target)
    cwts = jnp.array([1.0, 2.0, 0.5, 1.5], jnp.float32)

    out = jax.block_until_ready(
        focal_loss(logits, target, class_weights=cwts,
                   ignore_index=255, gamma=1.0))
    ref = _reference(logits, target, cwts, 255, 1.0)
    assert jnp.allclose(out, ref, rtol=1e-4, atol=1e-5), (out, ref)

    # --- test 2: bf16 logits stay bf16 in HBM, no class weights, gamma=2,
    #             N=1 with forced small tiles -> exercises the S=2 split ---
    N2, C2, H2, W2 = 1, 8, 16, 16
    lg2 = jax.random.normal(k4, (N2, C2, H2, W2), jnp.float32).astype(jnp.bfloat16)
    tg2 = jax.random.randint(k5, (N2, H2, W2), 0, C2).astype(jnp.int32)
    out2 = jax.block_until_ready(
        focal_loss(lg2, tg2, class_weights=None, ignore_index=255,
                   gamma=2.0, tile_hw=128))
    ref2 = _reference(lg2.astype(jnp.float32), tg2,
                      jnp.ones((C2,), jnp.float32), 255, 2.0)
    assert jnp.allclose(out2, ref2, rtol=1e-4, atol=1e-5), (out2, ref2)

    # --- test 3: ragged HW (25*25=625), phantom tile from the S-split,
    #             generic non-integer gamma=1.5 ---
    N3, C3, H3, W3 = 1, 3, 25, 25
    lg3 = jax.random.normal(k6, (N3, C3, H3, W3), jnp.float32)
    tg3 = jax.random.randint(k7, (N3, H3, W3), 0, C3).astype(jnp.int32)
    tg3 = tg3.at[0, 0, :5].set(255)           # a few ignored pixels
    cw3 = jnp.array([0.7, 1.3, 1.0], jnp.float32)
    out3 = jax.block_until_ready(
        focal_loss(lg3, tg3, class_weights=cw3, ignore_index=255,
                   gamma=1.5, tile_hw=128))
    ref3 = _reference(lg3, tg3, cw3, 255, 1.5)
    assert jnp.allclose(out3, ref3, rtol=1e-4, atol=1e-5), (out3, ref3)

    print("KERNEL_OK")
</pallas_src>

<mosaic_0001>
module attributes {stable_mosaic.version = 11 : i64} {
  func.func @_focal_kernel(%arg0: i32, %arg1: i32, %arg2: i32, %arg3: memref<1x4x256xf32, #tpu.memory_space<vmem>>, %arg4: memref<1x1x256xi32, #tpu.memory_space<vmem>>, %arg5: memref<4x1xf32, #tpu.memory_space<vmem>>, %arg6: memref<1x1x1x256xf32, #tpu.memory_space<vmem>>, %arg7: memref<1x1x1x256xf32, #tpu.memory_space<vmem>>) attributes {dimension_semantics = [#tpu.dimension_semantics<parallel>, #tpu.dimension_semantics<parallel>, #tpu.dimension_semantics<arbitrary>], iteration_bounds = array<i64: 2, 1, 1>, scalar_prefetch = 0 : i64, scratch_operands = 0 : i64, tpu.core_type = #tpu.core_type<tc>, window_params = [{transform_indices = @transform_0, window_bounds = array<i64: 1, 4, 256>}, {transform_indices = @transform_1, window_bounds = array<i64: 1, 1, 256>}, {pipeline_mode = #tpu.pipeline_mode<synchronous>, transform_indices = @transform_2, window_bounds = array<i64: 4, 1>}, {transform_indices = @transform_3, window_bounds = array<i64: 1, 1, 1, 256>}, {transform_indices = @transform_4, window_bounds = array<i64: 1, 1, 1, 256>}]} {
    %c0_i32 = arith.constant 0 : i32
    %0 = arith.cmpi eq, %arg2, %c0_i32 : i32
    %1 = arith.extui %0 : i1 to i32
    %c0_i32_0 = arith.constant 0 : i32
    %2 = arith.cmpi ne, %1, %c0_i32_0 : i32
    scf.if %2 {
      %cst_30 = arith.constant 0.000000e+00 : f32
      %58 = vector.broadcast %cst_30 : f32 to vector<1x256xf32>
      %c0_31 = arith.constant 0 : index
      %c0_32 = arith.constant 0 : index
      %c0_33 = arith.constant 0 : index
      %c0_34 = arith.constant 0 : index
      %59 = vector.load %arg6[%c0_31, %c0_32, %c0_33, %c0_34] : memref<1x1x1x256xf32, #tpu.memory_space<vmem>>, vector<1x1x1x256xf32>
      %60 = vector.shape_cast %59 : vector<1x1x1x256xf32> to vector<1x256xf32>
      %61 = vector.shape_cast %58 : vector<1x256xf32> to vector<1x1x1x256xf32>
      tpu.vector_store %arg6[%c0_31, %c0_32, %c0_33, %c0_34], %61 {strides = array<i32>} : memref<1x1x1x256xf32, #tpu.memory_space<vmem>>, vector<1x1x1x256xf32>,
      %cst_35 = arith.constant 0.000000e+00 : f32
      %62 = vector.broadcast %cst_35 : f32 to vector<1x256xf32>
      %c0_36 = arith.constant 0 : index
      %c0_37 = arith.constant 0 : index
      %c0_38 = arith.constant 0 : index
      %c0_39 = arith.constant 0 : index
      %63 = vector.load %arg7[%c0_36, %c0_37, %c0_38, %c0_39] : memref<1x1x1x256xf32, #tpu.memory_space<vmem>>, vector<1x1x1x256xf32>
      %64 = vector.shape_cast %63 : vector<1x1x1x256xf32> to vector<1x256xf32>
      %65 = vector.shape_cast %62 : vector<1x256xf32> to vector<1x1x1x256xf32>
      tpu.vector_store %arg7[%c0_36, %c0_37, %c0_38, %c0_39], %65 {strides = array<i32>} : memref<1x1x1x256xf32, #tpu.memory_space<vmem>>, vector<1x1x1x256xf32>,
    } else {
    }
    %c0 = arith.constant 0 : index
    %c0_1 = arith.constant 0 : index
    %c0_2 = arith.constant 0 : index
    %3 = vector.load %arg3[%c0, %c0_1, %c0_2] : memref<1x4x256xf32, #tpu.memory_space<vmem>>, vector<1x4x256xf32>
    %4 = vector.shape_cast %3 : vector<1x4x256xf32> to vector<4x256xf32>
    %c0_3 = arith.constant 0 : index
    %c0_4 = arith.constant 0 : index
    %c0_5 = arith.constant 0 : index
    %5 = vector.load %arg4[%c0_3, %c0_4, %c0_5] : memref<1x1x256xi32, #tpu.memory_space<vmem>>, vector<1x1x256xi32>
    %6 = vector.shape_cast %5 : vector<1x1x256xi32> to vector<1x256xi32>
    %c255_i32 = arith.constant 255 : i32
    %7 = vector.broadcast %c255_i32 : i32 to vector<1x256xi32>
    %8 = arith.cmpi ne, %6, %7 : vector<1x256xi32>
    %cst = arith.constant 0.000000e+00 : f32
    %9 = vector.shape_cast %8 : vector<1x256xi1> to vector<1x256xi1>
    %10 = vector.broadcast %9 : vector<1x256xi1> to vector<4x256xi1>
    %11 = vector.broadcast %cst : f32 to vector<4x256xf32>
    %12 = arith.select %10, %4, %11 : vector<4x256xi1>, vector<4x256xf32>
    %cst_6 = arith.constant dense<0xFF800000> : vector<256xf32>
    %13 = vector.multi_reduction <maximumf>, %12, %cst_6 [0] : vector<4x256xf32> to vector<256xf32>
    %14 = vector.shape_cast %13 : vector<256xf32> to vector<1x256xf32>
    %15 = vector.broadcast %14 : vector<1x256xf32> to vector<4x256xf32>
    %16 = arith.subf %12, %15 : vector<4x256xf32>
    %17 = math.exp %16 : vector<4x256xf32>
    %cst_7 = arith.constant dense<0.000000e+00> : vector<256xf32>
    %18 = vector.multi_reduction <add>, %17, %cst_7 [0] : vector<4x256xf32> to vector<256xf32>
    %19 = vector.shape_cast %18 : vector<256xf32> to vector<1x256xf32>
    %20 = math.log %19 : vector<1x256xf32>
    %21 = tpu.iota {dimensions = array<i32: 0>} : vector<4x256xi32>
    %22 = vector.broadcast %6 : vector<1x256xi32> to vector<4x256xi32>
    %23 = arith.cmpi eq, %21, %22 : vector<4x256xi32>
    %24 = arith.extui %23 : vector<4x256xi1> to vector<4x256xi32>
    %25 = arith.sitofp %24 : vector<4x256xi32> to vector<4x256xf32>
    %26 = arith.mulf %16, %25 : vector<4x256xf32>
    %cst_8 = arith.constant dense<0.000000e+00> : vector<256xf32>
    %27 = vector.multi_reduction <add>, %26, %cst_8 [0] : vector<4x256xf32> to vector<256xf32>
    %28 = vector.shape_cast %27 : vector<256xf32> to vector<1x256xf32>
    %29 = arith.mulf %17, %25 : vector<4x256xf32>
    %cst_9 = arith.constant dense<0.000000e+00> : vector<256xf32>
    %30 = vector.multi_reduction <add>, %29, %cst_9 [0] : vector<4x256xf32> to vector<256xf32>
    %31 = vector.shape_cast %30 : vector<256xf32> to vector<1x256xf32>
    %c0_10 = arith.constant 0 : index
    %c0_11 = arith.constant 0 : index
    %32 = vector.load %arg5[%c0_10, %c0_11] : memref<4x1xf32, #tpu.memory_space<vmem>>, vector<4x1xf32>
    %33 = vector.broadcast %32 : vector<4x1xf32> to vector<4x256xf32>
    %34 = arith.mulf %33, %25 : vector<4x256xf32>
    %cst_12 = arith.constant dense<0.000000e+00> : vector<256xf32>
    %35 = vector.multi_reduction <add>, %34, %cst_12 [0] : vector<4x256xf32> to vector<256xf32>
    %36 = vector.shape_cast %35 : vector<256xf32> to vector<1x256xf32>
    %37 = arith.subf %20, %28 : vector<1x256xf32>
    %38 = arith.divf %31, %19 : vector<1x256xf32>
    %cst_13 = arith.constant 1.000000e+00 : f32
    %39 = vector.broadcast %cst_13 : f32 to vector<1x256xf32>
    %40 = arith.subf %39, %38 : vector<1x256xf32>
    %41 = arith.extui %8 : vector<1x256xi1> to vector<1x256xi32>
    %42 = arith.sitofp %41 : vector<1x256xi32> to vector<1x256xf32>
    %c0_14 = arith.constant 0 : index
    %c0_15 = arith.constant 0 : index
    %c0_16 = arith.constant 0 : index
    %c0_17 = arith.constant 0 : index
    %43 = vector.load %arg6[%c0_14, %c0_15, %c0_16, %c0_17] : memref<1x1x1x256xf32, #tpu.memory_space<vmem>>, vector<1x1x1x256xf32>
    %44 = vector.shape_cast %43 : vector<1x1x1x256xf32> to vector<1x256xf32>
    %45 = arith.mulf %36, %40 : vector<1x256xf32>
    %46 = arith.mulf %45, %37 : vector<1x256xf32>
    %47 = arith.mulf %46, %42 : vector<1x256xf32>
    %48 = arith.addf %44, %47 : vector<1x256xf32>
    %c0_18 = arith.constant 0 : index
    %c0_19 = arith.constant 0 : index
    %c0_20 = arith.constant 0 : index
    %c0_21 = arith.constant 0 : index
    %49 = vector.load %arg6[%c0_18, %c0_19, %c0_20, %c0_21] : memref<1x1x1x256xf32, #tpu.memory_space<vmem>>, vector<1x1x1x256xf32>
    %50 = vector.shape_cast %49 : vector<1x1x1x256xf32> to vector<1x256xf32>
    %51 = vector.shape_cast %48 : vector<1x256xf32> to vector<1x1x1x256xf32>
    tpu.vector_store %arg6[%c0_18, %c0_19, %c0_20, %c0_21], %51 {strides = array<i32>} : memref<1x1x1x256xf32, #tpu.memory_space<vmem>>, vector<1x1x1x256xf32>,
    %c0_22 = arith.constant 0 : index
    %c0_23 = arith.constant 0 : index
    %c0_24 = arith.constant 0 : index
    %c0_25 = arith.constant 0 : index
    %52 = vector.load %arg7[%c0_22, %c0_23, %c0_24, %c0_25] : memref<1x1x1x256xf32, #tpu.memory_space<vmem>>, vector<1x1x1x256xf32>
    %53 = vector.shape_cast %52 : vector<1x1x1x256xf32> to vector<1x256xf32>
    %54 = arith.addf %53, %42 : vector<1x256xf32>
    %c0_26 = arith.constant 0 : index
    %c0_27 = arith.constant 0 : index
    %c0_28 = arith.constant 0 : index
    %c0_29 = arith.constant 0 : index
    %55 = vector.load %arg7[%c0_26, %c0_27, %c0_28, %c0_29] : memref<1x1x1x256xf32, #tpu.memory_space<vmem>>, vector<1x1x1x256xf32>
    %56 = vector.shape_cast %55 : vector<1x1x1x256xf32> to vector<1x256xf32>
    %57 = vector.shape_cast %54 : vector<1x256xf32> to vector<1x1x1x256xf32>
    tpu.vector_store %arg7[%c0_26, %c0_27, %c0_28, %c0_29], %57 {strides = array<i32>} : memref<1x1x1x256xf32, #tpu.memory_space<vmem>>, vector<1x1x1x256xf32>,
    return
  }
  func.func @transform_0(%arg0: i32, %arg1: i32, %arg2: i32) -> (i32, i32, i32) {
    %c1_i32 = arith.constant 1 : i32
    %0 = arith.muli %arg1, %c1_i32 : i32
    %1 = arith.addi %0, %arg2 : i32
    %c0_i32 = arith.constant 0 : i32
    %2 = arith.minsi %1, %c0_i32 : i32
    %c0_i32_0 = arith.constant 0 : i32
    %c0_i32_1 = arith.constant 0 : i32
    return %arg0, %c0_i32_0, %2 : i32, i32, i32
  }
  func.func @transform_1(%arg0: i32, %arg1: i32, %arg2: i32) -> (i32, i32, i32) {
    %c1_i32 = arith.constant 1 : i32
    %0 = arith.muli %arg1, %c1_i32 : i32
    %1 = arith.addi %0, %arg2 : i32
    %c0_i32 = arith.constant 0 : i32
    %c0_i32_0 = arith.constant 0 : i32
    return %arg0, %c0_i32, %1 : i32, i32, i32
  }
  func.func @transform_2(%arg0: i32, %arg1: i32, %arg2: i32) -> (i32, i32) {
    %c0_i32 = arith.constant 0 : i32
    %c0_i32_0 = arith.constant 0 : i32
    %c0_i32_1 = arith.constant 0 : i32
    return %c0_i32, %c0_i32_0 : i32, i32
  }
  func.func @transform_3(%arg0: i32, %arg1: i32, %arg2: i32) -> (i32, i32, i32, i32) {
    %c0_i32 = arith.constant 0 : i32
    %c0_i32_0 = arith.constant 0 : i32
    %c0_i32_1 = arith.constant 0 : i32
    return %arg0, %arg1, %c0_i32, %c0_i32_0 : i32, i32, i32, i32
  }
  func.func @transform_4(%arg0: i32, %arg1: i32, %arg2: i32) -> (i32, i32, i32, i32) {
    %c0_i32 = arith.constant 0 : i32
    %c0_i32_0 = arith.constant 0 : i32
    %c0_i32_1 = arith.constant 0 : i32
    return %arg0, %arg1, %c0_i32, %c0_i32_0 : i32, i32, i32, i32
  }
}

</mosaic_0001>

<llo_original>
// kernel: tpu_custom_call.1
$region0: #{tpu_custom_call.1}
  #allocation0 [shape = 'u32[]', space=smem, size = 0x4, offset = 0x4, fixed_abs, tag = 'smem constant byte address 0x4 - core index']
  #allocation1 [shape = 'u32[144,128]{1,0:T(1,128)}', space=vmem, size = 0x12000, scoped, tag = 'internal scratch']
  %s0 = inlined_call_operand.hbm [shape: f32[2,4,256], index: 0, kind: input, shape index: {}]
  %s1 = inlined_call_operand.vmem [shape: s32[2,1,256], index: 1, kind: input, shape index: {}]
  %s2 = inlined_call_operand.vmem [shape: f32[4,1], index: 2, kind: input, shape index: {}]
  %s3 = inlined_call_operand.hbm [shape: f32[2,1,1,256], index: 3, kind: output, shape index: {0}]
  %s4 = inlined_call_operand.hbm [shape: f32[2,1,1,256], index: 4, kind: output, shape index: {1}]
  %5 = xla_tuple %s3, %s4
  %s6 = sld [smem:[#allocation0]]
  $region61: #{tpu_custom_call.1} parent=0
    _
  %s8 = ssub.s32 1, %s6
  %s9 = scalar_select 0, %s8, %s6
  $region1: #{tpu_custom_call.1} parent=0
    #allocation2 [shape = 'u8[8192]{0}', space=vmem, size = 0x2000, scoped, tag = 'input window, operand 0']
    #allocation3 [shape = 's32[2]{0}', space=sflag, size = 0x8, scoped, tag = 'scoped memory for tpu_custom_call.1']
    #allocation4 [shape = 's32[2]{0}', space=sflag, size = 0x8, scoped, tag = 'scoped memory for tpu_custom_call.1']
    #allocation5 [shape = 'u8[2048]{0}', space=vmem, size = 0x800, scoped, tag = 'output window, operand 0']
    #allocation6 [shape = 'u8[2048]{0}', space=vmem, size = 0x800, scoped, tag = 'output window, operand 1']
    #allocation7 [shape = 's32[2]{0}', space=sflag, size = 0x8, scoped, tag = 'scoped memory for tpu_custom_call.1']
    %10 = vsyncpa [#allocation3], 0
    %s11 = scalar_lea.sflag [#allocation3], 1
    %12 = vsyncpa %s11, 0
    %13 = vsyncpa [#allocation4], 0
    %s14 = scalar_lea.sflag [#allocation4], 1
    %15 = vsyncpa %s14, 0
    %16 = vsyncpa [#allocation7], 0
    %s17 = scalar_lea.sflag [#allocation7], 1
    %18 = vsyncpa %s17, 0
    loop: start=0, step=1, limit=4
    $region2: #{tpu_custom_call.1} parent=1 // loop_pre_header
      _
    $region3: #{tpu_custom_call.1} parent=1 // loop_header
      %s20 = sphi 0, %s24
      %p21 = scmp.ge.s32.totalorder %s20, 4
      %s27 = sphi 0, %s46
      %s28 = sphi 0, %s42
      %s29 = sphi 0, %s38
      %s30 = sphi 0, %s27
      %s31 = sphi 0, %s28
      %s32 = sphi 0, %s29
      %s33 = sphi 0, %s30
      %s34 = sphi 0, %s31
      %s35 = sphi 0, %s32
      %s57 = sphi 0, %s59
      %s60 = sphi 0, %s57
      %s61 = sphi 0, %s60
      %s77 = sphi 0, %s61
      %s87 = sphi 0, %s89
      %s90 = sphi 0, %s87
      %s91 = sphi 0, %s90
      %s107 = sphi 0, %s91
      %s111 = sphi 0, %s111
      %s113 = sphi 0, %s111
      %s114 = sphi 0, %s113
      %s128 = sphi 0, %s114
      %s136 = sphi 0, %s138
      %s139 = sphi 0, %s136
      %s140 = sphi 0, %s139
      %s156 = sphi 0, %s140
      %s164 = sphi 0, %s166
      %s167 = sphi 0, %s164
      %s168 = sphi 0, %s167
      %s184 = sphi 0, %s168
    $region4: #{tpu_custom_call.1} parent=1 // loop_header_branch
      %23 = sbr.rel (%p21) target = $region8
    $region5: #{tpu_custom_call.1} parent=1 // loop_body
      %s25 = ssub.s32 %s20, 1
      %s26 = ssub.s32 %s20, 2
      %s36 = sadd.s32 1, %s29
      %p37 = scmp.ge.s32.totalorder %s36, 1
      %s38 = scalar_select %p37, 0, %s36
      %s39 = sadd.s32 1, %s28
      %s40 = scalar_select %p37, %s39, %s28
      %p41 = scmp.ge.s32.totalorder %s40, 1
      %s42 = scalar_select %p41, 0, %s40
      %s43 = sadd.s32 1, %s27
      %s44 = scalar_select %p41, %s43, %s27
      %p45 = scmp.ge.s32.totalorder %s44, 2
      %s46 = scalar_select %p45, 0, %s44
      %s47 = sadd.s32 %s28, %s29
      %p48 = scmp.lt.s32.totalorder %s47, 0
      %s49 = scalar_select %p48, %s47, 0
      %s50 = sadd.s32 %s42, %s38
      %p51 = scmp.lt.s32.totalorder %s50, 0
      %s52 = scalar_select %p51, %s50, 0
      %s53 = ssub.s32 %s27, %s46
      %s54 = ssub.s32 %s49, %s52
      %s55 = sor.u32 %s53, %s54
      %p56 = scmp.eq.s32.totalorder %s55, 0
      %s58 = sadd.s32 %s57, 1
      %s59 = scalar_select %p56, %s57, %s58
      %p62 = pneg %p56
      %p63 = scmp.eq.s32.totalorder %s20, 1
      %p64 = por %p62, %p63
      %p65 = scmp.ne.s32.totalorder %s57, %s60
      %p66 = scmp.eq.s32.totalorder %s20, 0
      %p67 = por %p65, %p66
      %p68 = scmp.ne.s32.totalorder %s57, %s60
      %p69 = scmp.eq.s32.totalorder %s25, 1
      %p70 = por %p68, %p69
      %p71 = scmp.ne.s32.totalorder %s60, %s61
      %p72 = scmp.eq.s32.totalorder %s25, 0
      %p73 = por %p71, %p72
      %p74 = scmp.ne.s32.totalorder %s60, %s61
      %p75 = scmp.eq.s32.totalorder %s26, 1
      %p76 = por %p74, %p75
      %p78 = scmp.ne.s32.totalorder %s61, %s77
      %p79 = scmp.eq.s32.totalorder %s26, 0
      %p80 = por %p78, %p79
      %s81 = sadd.s32 %s28, %s29
      %s82 = sadd.s32 %s42, %s38
      %s83 = ssub.s32 %s27, %s46
      %s84 = ssub.s32 %s81, %s82
      %s85 = sor.u32 %s83, %s84
      %p86 = scmp.eq.s32.totalorder %s85, 0
      %s88 = sadd.s32 %s87, 1
      %s89 = scalar_select %p86, %s87, %s88
      %p92 = pneg %p86
      %p93 = scmp.eq.s32.totalorder %s20, 1
      %p94 = por %p92, %p93
      %p95 = scmp.ne.s32.totalorder %s87, %s90
      %p96 = scmp.eq.s32.totalorder %s20, 0
      %p97 = por %p95, %p96
      %p98 = scmp.ne.s32.totalorder %s87, %s90
      %p99 = scmp.eq.s32.totalorder %s25, 1
      %p100 = por %p98, %p99
      %p101 = scmp.ne.s32.totalorder %s90, %s91
      %p102 = scmp.eq.s32.totalorder %s25, 0
      %p103 = por %p101, %p102
      %p104 = scmp.ne.s32.totalorder %s90, %s91
      %p105 = scmp.eq.s32.totalorder %s26, 1
      %p106 = por %p104, %p105
      %p108 = scmp.ne.s32.totalorder %s91, %s107
      %p109 = scmp.eq.s32.totalorder %s26, 0
      %p110 = por %p108, %p109
      %s112 = sadd.s32 %s111, 1
      %p115 = scmp.eq.s32.totalorder %s20, 1
      %p116 = scmp.ne.s32.totalorder %s111, %s113
      %p117 = scmp.eq.s32.totalorder %s20, 0
      %p118 = por %p116, %p117
      %p119 = scmp.ne.s32.totalorder %s111, %s113
      %p120 = scmp.eq.s32.totalorder %s25, 1
      %p121 = por %p119, %p120
      %p122 = scmp.ne.s32.totalorder %s113, %s114
      %p123 = scmp.eq.s32.totalorder %s25, 0
      %p124 = por %p122, %p123
      %p125 = scmp.ne.s32.totalorder %s113, %s114
      %p126 = scmp.eq.s32.totalorder %s26, 1
      %p127 = por %p125, %p126
      %p129 = scmp.ne.s32.totalorder %s114, %s128
      %p130 = scmp.eq.s32.totalorder %s26, 0
      %p131 = por %p129, %p130
      %s132 = ssub.s32 %s27, %s46
      %s133 = ssub.s32 %s28, %s42
      %s134 = sor.u32 %s132, %s133
      %p135 = scmp.eq.s32.totalorder %s134, 0
      %s137 = sadd.s32 %s136, 1
      %s138 = scalar_select %p135, %s136, %s137
      %p141 = pneg %p135
      %p142 = scmp.eq.s32.totalorder %s20, 1
      %p143 = por %p141, %p142
      %p144 = scmp.ne.s32.totalorder %s136, %s139
      %p145 = scmp.eq.s32.totalorder %s20, 0
      %p146 = por %p144, %p145
      %p147 = scmp.ne.s32.totalorder %s136, %s139
      %p148 = scmp.eq.s32.totalorder %s25, 1
      %p149 = por %p147, %p148
      %p150 = scmp.ne.s32.totalorder %s139, %s140
      %p151 = scmp.eq.s32.totalorder %s25, 0
      %p152 = por %p150, %p151
      %p153 = scmp.ne.s32.totalorder %s139, %s140
      %p154 = scmp.eq.s32.totalorder %s26, 1
      %p155 = por %p153, %p154
      %p157 = scmp.ne.s32.totalorder %s140, %s156
      %p158 = scmp.eq.s32.totalorder %s26, 0
      %p159 = por %p157, %p158
      %s160 = ssub.s32 %s27, %s46
      %s161 = ssub.s32 %s28, %s42
      %s162 = sor.u32 %s160, %s161
      %p163 = scmp.eq.s32.totalorder %s162, 0
      %s165 = sadd.s32 %s164, 1
      %s166 = scalar_select %p163, %s164, %s165
      %p169 = pneg %p163
      %p170 = scmp.eq.s32.totalorder %s20, 1
      %p171 = por %p169, %p170
      %p172 = scmp.ne.s32.totalorder %s164, %s167
      %p173 = scmp.eq.s32.totalorder %s20, 0
      %p174 = por %p172, %p173
      %p175 = scmp.ne.s32.totalorder %s164, %s167
      %p176 = scmp.eq.s32.totalorder %s25, 1
      %p177 = por %p175, %p176
      %p178 = scmp.ne.s32.totalorder %s167, %s168
      %p179 = scmp.eq.s32.totalorder %s25, 0
      %p180 = por %p178, %p179
      %p181 = scmp.ne.s32.totalorder %s167, %s168
      %p182 = scmp.eq.s32.totalorder %s26, 1
      %p183 = por %p181, %p182
      %p185 = scmp.ne.s32.totalorder %s168, %s184
      %p186 = scmp.eq.s32.totalorder %s26, 0
      %p187 = por %p185, %p186
      %p188 = scmp.le.s32.totalorder 1, %s20
      %p189 = scmp.lt.s32.totalorder %s20, 3
      %p190 = pnand %p188, %p189
      %p191 = pneg %p190
      // Predicated region
      $region9: #{tpu_custom_call.1} parent=5 // pred_check
        _
      $region10: #{tpu_custom_call.1} parent=5 // pred_check_branch
        %193 = sbr.rel (%p190) target = $region12
      $region11: #{tpu_custom_call.1} parent=5 // pred_region
        %s194 = ssub.s32 %s20, 1
        // Predicated region
        $region13: #{tpu_custom_call.1} parent=11 // pred_check
          %p195 = pneg %p124
        $region14: #{tpu_custom_call.1} parent=11 // pred_check_branch
          %197 = sbr.rel (%p195) target = $region16
        $region15: #{tpu_custom_call.1} parent=11 // pred_region
          _
        $region16: #{tpu_custom_call.1} parent=11 // pred_fallthru
          _
      $region12: #{tpu_custom_call.1} parent=5 // pred_fallthru
        _
      %p198 = scmp.lt.s32.totalorder %s20, 2
      // Predicated region
      $region17: #{tpu_custom_call.1} parent=5 // pred_check
        %p199 = pneg %p198
      $region18: #{tpu_custom_call.1} parent=5 // pred_check_branch
        %201 = sbr.rel (%p199) target = $region20
      $region19: #{tpu_custom_call.1} parent=5 // pred_region
        // Predicated region
        $region21: #{tpu_custom_call.1} parent=19 // pred_check
          %p202 = pneg %p67
        $region22: #{tpu_custom_call.1} parent=19 // pred_check_branch
          %204 = sbr.rel (%p202) target = $region24
        $region23: #{tpu_custom_call.1} parent=19 // pred_region
          %s205 = sand.u32 %s57, 1
          %s206 = scalar_lea.sflag [#allocation3], %s205
          %s207 = sand.u32 %s57, 1
          %s208 = smul.addr %s207, 8
          %s209 = scalar_lea.vmem [#allocation2], %s208
          %s210 = sadd.s32 %s28, %s29
          %p211 = scmp.lt.s32.totalorder %s210, 0
          %s212 = scalar_select %p211, %s210, 0
          %s213 = smul.u32 2, %s212
          %s215 = ssub.s32 128, 128
          %216 = vsyncadd %s206, %s215
          %s217 = smul.addr %s27, 2
          %s218 = sadd.s32 %s213, %s217
          %s219 = smul.addr %s218, 64
          %s220 = scalar_lea.hbm %s0, %s219
          %s222 = sshll.u32 %s209, 4
          %s223 = int_to_ptr.vmem [resolvable:$true] %s222
          %225 = dma.hbm_to_vmem [thread:$0]  %s220, 128, %s223, %s206
        $region24: #{tpu_custom_call.1} parent=19 // pred_fallthru
          _
        // Predicated region
        $region25: #{tpu_custom_call.1} parent=19 // pred_check
          %p226 = pneg %p97
        $region26: #{tpu_custom_call.1} parent=19 // pred_check_branch
          %228 = sbr.rel (%p226) target = $region28
        $region27: #{tpu_custom_call.1} parent=19 // pred_region
          %s229 = sadd.s32 %s28, %s29
          %s230 = smul.u32 2, %s229
          %p231 = scmp.lt.s32.totalorder %s27, 1
          %s232 = scalar_select %p231, %s27, 1
          %p233 = scmp.lt.s32.totalorder %s230, 1
          %s234 = scalar_select %p233, %s230, 1
          %s235 = smul.addr %s232, 2
          %s236 = sadd.s32 %s234, %s235
          %s237 = scalar_lea.vmem %s1, %s236
          %s238 = sadd.s32 %s28, %s29
          %s239 = smul.u32 2, %s238
        $region28: #{tpu_custom_call.1} parent=19 // pred_fallthru
          _
      $region20: #{tpu_custom_call.1} parent=5 // pred_fallthru
        _
      %p240 = scmp.le.s32.totalorder 1, %s20
      %p241 = scmp.lt.s32.totalorder %s20, 3
      %p242 = pnand %p240, %p241
      %p243 = pneg %p242
      // Predicated region
      $region29: #{tpu_custom_call.1} parent=5 // pred_check
        _
      $region30: #{tpu_custom_call.1} parent=5 // pred_check_branch
        %245 = sbr.rel (%p242) target = $region32
      $region31: #{tpu_custom_call.1} parent=5 // pred_region
        %s246 = ssub.s32 %s20, 1
        %s247 = sand.u32 %s60, 1
        %s248 = scalar_lea.sflag [#allocation3], %s247
        %s249 = sand.u32 %s60, 1
        %s250 = smul.addr %s249, 8
        %s251 = scalar_lea.vmem [#allocation2], %s250
        // Predicated region
        $region33: #{tpu_custom_call.1} parent=31 // pred_check
          %p252 = pneg %p73
        $region34: #{tpu_custom_call.1} parent=31 // pred_check_branch
          %254 = sbr.rel (%p252) target = $region36
        $region35: #{tpu_custom_call.1} parent=31 // pred_region
          %255 = dma.done %s248, 128
        $region36: #{tpu_custom_call.1} parent=31 // pred_fallthru
          _
        %s256 = sand.u32 %s60, 1
        %s257 = scalar_lea.sflag [#allocation3], %s256
        %s258 = sand.u32 %s60, 1
        %s259 = smul.addr %s258, 8
        %s260 = scalar_lea.vmem [#allocation2], %s259
        %p261 = pneg %p73
        %p262 = pneg %p70
        %s263 = sadd.s32 %s31, %s32
        %s264 = smul.u32 2, %s263
        %p265 = scmp.lt.s32.totalorder %s30, 1
        %s266 = scalar_select %p265, %s30, 1
        %p267 = scmp.lt.s32.totalorder %s264, 1
        %s268 = scalar_select %p267, %s264, 1
        %s269 = smul.addr %s266, 2
        %s270 = sadd.s32 %s268, %s269
        %s271 = scalar_lea.vmem %s1, %s270
        %p272 = pneg %p103
        %p273 = pneg %p100
        %p274 = pneg %p124
        %p275 = pneg %p121
        %p276 = pneg %p152
        %p277 = pneg %p149
        %s278 = sand.u32 %s139, 1
        %s279 = scalar_lea.sflag [#allocation4], %s278
        %s280 = sand.u32 %s139, 1
        %s281 = smul.addr %s280, 2
        %s282 = scalar_lea.vmem [#allocation5], %s281
        %p283 = pneg %p180
        %p284 = pneg %p177
        %s285 = sand.u32 %s167, 1
        %s286 = scalar_lea.sflag [#allocation7], %s285
        %s287 = sand.u32 %s167, 1
        %s288 = smul.addr %s287, 2
        %s289 = scalar_lea.vmem [#allocation6], %s288
        %s290 = sadd.s32 %s31, %s32
        %p291 = scmp.lt.s32.totalorder %s290, 0
        %s292 = scalar_select %p291, %s290, 0
        %s293 = smul.u32 2, %s292
        %s294 = sadd.s32 %s31, %s32
        %s295 = smul.u32 2, %s294
        %p296 = scmp.lt.s32.totalorder %s30, 1
        %s297 = scalar_select %p296, %s30, 1
        %p298 = scmp.lt.s32.totalorder %s295, 1
        %s299 = scalar_select %p298, %s295, 1
        %s300 = smul.addr %s297, 2
        %s301 = sadd.s32 %s299, %s300
        %s302 = scalar_lea.vmem %s1, %s301
        %s303 = sadd.s32 %s31, %s32
        %s304 = smul.u32 2, %s303
        %p305 = scmp.eq.s32.totalorder %s32, 0
        // Predicated region
        $region37: #{tpu_custom_call.1} parent=31 // pred_check
          %p306 = pneg %p305
        $region38: #{tpu_custom_call.1} parent=31 // pred_check_branch
          %308 = sbr.rel (%p306) target = $region40
        $region39: #{tpu_custom_call.1} parent=31 // pred_region
          %v309 = vlaneseq
          %vm310 = vcmp.ge.s32.totalorder %v309, 0
          %vm311 = vcmp.lt.s32.totalorder %v309, 256
          %vm312 = vmand %vm310, %vm311
          %313 = vst.msk [vmem:[%s282] sm:$0x3] %vm312, 0.0
          %314 = vst.msk [vmem:[%s289] sm:$0x3] %vm312, 0.0
        $region40: #{tpu_custom_call.1} parent=31 // pred_fallthru
          _
        %v315 = vld [vmem:[%s251] sm:$0xff]
        %v316 = vld [vmem:[%s302] sm:$0x3]
        %vm317 = vcmp.ne.s32.totalorder %v316, 255
        %v318 = vsel %vm317, 1, 0
        %v319 = vlaneseq
        %v320 = vshrl.u32 %v319, 7
        %v321 = vsub.s32 0, %v320
        %v322 = vrot.slane %v318, %v321
        %v323 = vlaneseq
        %v324 = vshrl.u32 %v323, 7
        %v325 = vsub.s32 1, %v324
        %v326 = vrot.slane %v318, %v325
        %vm327 = vcmp.eq.s32.totalorder %v322, 1
        %vm328 = vcmp.eq.s32.totalorder %v326, 1
        %v330 = vcombine.high %v315, %v315
        %v332 = vsel %vm327, %v315, 0.0
        %v333 = vsel %vm328, %v330, 0.0
        %vm334 = vcmask 1043456
        %v335 = vsel %vm334, %v332, -inf
        %v336 = vrot.slane %v335, 4
        %v337 = vmax.f32 %v335, %v336
        %v338 = vrot.slane %v337, 2
        %v339 = vmax.f32 %v337, %v338
        %v340 = vrot.slane %v339, 1
        %v341 = vmax.f32 %v339, %v340
        %v342 = vsel %vm334, %v333, -inf
        %v343 = vrot.slane %v342, 4
        %v344 = vmax.f32 %v342, %v343
        %v345 = vrot.slane %v344, 2
        %v346 = vmax.f32 %v344, %v345
        %v347 = vrot.slane %v346, 1
        %v348 = vmax.f32 %v346, %v347
        %v349 = vsub.f32 %v332, %v341
        %v350 = vsub.f32 %v333, %v348
        %v351 = vmul.f32 %v349, 1.442695
        %v352 = vpow.pop %v351
        %v353 = vmul.f32 %v350, 1.442695
        %v354 = vpow.pop %v353
        %v355 = vsel %vm334, %v352, 0.0
        %v356 = vrot.slane %v355, 4
        %v357 = vadd.f32 %v355, %v356
        %v358 = vrot.slane %v357, 2
        %v359 = vadd.f32 %v357, %v358
        %v360 = vrot.slane %v359, 1
        %v361 = vadd.f32 %v359, %v360
        %v362 = vsel %vm334, %v354, 0.0
        %v363 = vrot.slane %v362, 4
        %v364 = vadd.f32 %v362, %v363
        %v365 = vrot.slane %v364, 2
        %v366 = vadd.f32 %v364, %v365
        %v367 = vrot.slane %v366, 1
        %v368 = vadd.f32 %v366, %v367
        %v369 = vlog2.pop %v361
        %v370 = vmul.f32 %v369, 0.6931472
        %v371 = vlog2.pop %v368
        %v372 = vmul.f32 %v371, 0.6931472
        %v373 = vlaneseq
        %v374 = vshrl.u32 %v373, 7
        %v375 = vlaneseq
        %v376 = vshrl.u32 %v375, 7
        %v377 = vsub.s32 0, %v376
        %v378 = vrot.slane %v316, %v377
        %v379 = vlaneseq
        %v380 = vshrl.u32 %v379, 7
        %v381 = vsub.s32 1, %v380
        %v382 = vrot.slane %v316, %v381
        %vm383 = vcmp.eq.s32.totalorder %v374, %v378
        %vm384 = vcmp.eq.s32.totalorder %v374, %v382
        %v385 = vsel %vm383, 1, 0
        %v386 = vsel %vm384, 1, 0
        %v387 = vcvt.s32.f32 %v385
        %v388 = vcvt.s32.f32 %v386
        %v389 = vmul.f32 %v349, %v387
        %v390 = vmul.f32 %v350, %v388
        %v391 = vsel %vm334, %v389, 0.0
        %v392 = vrot.slane %v391, 4
        %v393 = vadd.f32 %v391, %v392
        %v394 = vrot.slane %v393, 2
        %v395 = vadd.f32 %v393, %v394
        %v396 = vrot.slane %v395, 1
        %v397 = vadd.f32 %v395, %v396
        %v398 = vsel %vm334, %v390, 0.0
        %v399 = vrot.slane %v398, 4
        %v400 = vadd.f32 %v398, %v399
        %v401 = vrot.slane %v400, 2
        %v402 = vadd.f32 %v400, %v401
        %v403 = vrot.slane %v402, 1
        %v404 = vadd.f32 %v402, %v403
        %v405 = vmul.f32 %v352, %v387
        %v406 = vmul.f32 %v354, %v388
        %v407 = vsel %vm334, %v405, 0.0
        %v408 = vrot.slane %v407, 4
        %v409 = vadd.f32 %v407, %v408
        %v410 = vrot.slane %v409, 2
        %v411 = vadd.f32 %v409, %v410
        %v412 = vrot.slane %v411, 1
        %v413 = vadd.f32 %v411, %v412
        %v414 = vsel %vm334, %v406, 0.0
        %v415 = vrot.slane %v414, 4
        %v416 = vadd.f32 %v414, %v415
        %v417 = vrot.slane %v416, 2
        %v418 = vadd.f32 %v416, %v417
        %v419 = vrot.slane %v418, 1
        %v420 = vadd.f32 %v418, %v419
        %v421 = vld [vmem:[%s2] sm:$0xf]
        %423 = vset.pattern.permute.xlu0 0
        %424 = vperm.xlu0 %423, %v421
        %v425 = vpop.permute.xlu0 %424
        %v427 = vmul.f32 %v425, %v387
        %v428 = vmul.f32 %v425, %v388
        %v429 = vsel %vm334, %v427, 0.0
        %v430 = vrot.slane %v429, 4
        %v431 = vadd.f32 %v429, %v430
        %v432 = vrot.slane %v431, 2
        %v433 = vadd.f32 %v431, %v432
        %v434 = vrot.slane %v433, 1
        %v435 = vadd.f32 %v433, %v434
        %v436 = vsel %vm334, %v428, 0.0
        %v437 = vrot.slane %v436, 4
        %v438 = vadd.f32 %v436, %v437
        %v439 = vrot.slane %v438, 2
        %v440 = vadd.f32 %v438, %v439
        %v441 = vrot.slane %v440, 1
        %v442 = vadd.f32 %v440, %v441
        %v443 = vsub.f32 %v370, %v397
        %v444 = vsub.f32 %v372, %v404
        %v445 = vrcp.pop %v361
        %v446 = vmul.f32 %v413, %v445
        %v447 = vrcp.pop %v368
        %v448 = vmul.f32 %v420, %v447
        %v449 = vsub.f32 1.0, %v446
        %v450 = vsub.f32 1.0, %v448
        %v451 = vcvt.s32.f32 %v318
        %v452 = vld [vmem:[%s282] sm:$0x3]
        %v453 = vmul.f32 %v435, %v449
        %v454 = vmul.f32 %v442, %v450
        %v455 = vmul.f32 %v453, %v443
        %v456 = vmul.f32 %v454, %v444
        %v458 = vlaneseq
        %v459 = vshrl.u32 %v458, 7
        %v460 = vsub.s32 0, %v459
        %v461 = vrot.slane %v451, %v460
        %v462 = vlaneseq
        %v463 = vshrl.u32 %v462, 7
        %v464 = vsub.s32 1, %v463
        %v465 = vrot.slane %v451, %v464
        %v468 = vmul.f32 %v455, %v461
        %v469 = vmul.f32 %v456, %v465
        %v472 = vcombine.low %v468, %v469
        %v474 = vunpack.c.l.s4 1966171168
        %v475 = vunpack.c.0.s8 %v474
        %v476 = vlaneseq
        %v477 = vshrl.u32 %v476, 7
        %v478 = vsub.s32 %v475, %v477
        %v479 = vrot.slane %v472, %v478
        %v481 = vunpack.c.l.s4 1966171168
        %v482 = vunpack.c.0.s8 %v481
        %v483 = vlaneseq
        %v484 = vshrl.u32 %v483, 7
        %v485 = vsub.s32 %v482, %v484
        %v486 = vrot.slane %v479, %v485
        %v488 = vadd.f32 %v452, %v486
        %v489 = vlaneseq
        %vm490 = vcmp.ge.s32.totalorder %v489, 0
        %vm491 = vcmp.lt.s32.totalorder %v489, 256
        %vm492 = vmand %vm490, %vm491
        %493 = vst.msk [vmem:[%s282] sm:$0x3] %vm492, %v488
        %v494 = vld [vmem:[%s289] sm:$0x3]
        %v495 = vadd.f32 %v494, %v451
        %496 = vst.msk [vmem:[%s289] sm:$0x3] %vm492, %v495
        %s497 = sand.u32 %s139, 1
        %s498 = scalar_lea.sflag [#allocation4], %s497
        %s499 = sand.u32 %s139, 1
        %s500 = smul.addr %s499, 2
        %s501 = scalar_lea.vmem [#allocation5], %s500
        %s502 = sand.u32 %s167, 1
        %s503 = scalar_lea.sflag [#allocation7], %s502
        %s504 = sand.u32 %s167, 1
        %s505 = smul.addr %s504, 2
        %s506 = scalar_lea.vmem [#allocation6], %s505
        // Predicated region
        $region41: #{tpu_custom_call.1} parent=31 // pred_check
          %p507 = pneg %p149
        $region42: #{tpu_custom_call.1} parent=31 // pred_check_branch
          %509 = sbr.rel (%p507) target = $region44
        $region43: #{tpu_custom_call.1} parent=31 // pred_region
          %s511 = ssub.s32 32, 32
          %512 = vsyncadd %s498, %s511
          %s513 = smul.addr %s31, 2
          %s514 = smul.addr %s30, 2
          %s515 = sadd.s32 %s513, %s514
          %s516 = smul.addr %s515, 16
          %s517 = scalar_lea.hbm %s3, %s516
          %s519 = sshll.u32 %s501, 4
          %s520 = int_to_ptr.vmem [resolvable:$true] %s519
          %522 = dma.vmem_to_hbm [thread:$0]  %s520, 32, %s517, %s498
        $region44: #{tpu_custom_call.1} parent=31 // pred_fallthru
          _
        // Predicated region
        $region45: #{tpu_custom_call.1} parent=31 // pred_check
          %p523 = pneg %p177
        $region46: #{tpu_custom_call.1} parent=31 // pred_check_branch
          %525 = sbr.rel (%p523) target = $region48
        $region47: #{tpu_custom_call.1} parent=31 // pred_region
          %s527 = ssub.s32 32, 32
          %528 = vsyncadd %s503, %s527
          %s529 = smul.addr %s31, 2
          %s530 = smul.addr %s30, 2
          %s531 = sadd.s32 %s529, %s530
          %s532 = smul.addr %s531, 16
          %s533 = scalar_lea.hbm %s4, %s532
          %s535 = sshll.u32 %s506, 4
          %s536 = int_to_ptr.vmem [resolvable:$true] %s535
          %538 = dma.vmem_to_hbm [thread:$0]  %s536, 32, %s533, %s503
        $region48: #{tpu_custom_call.1} parent=31 // pred_fallthru
          _
      $region32: #{tpu_custom_call.1} parent=5 // pred_fallthru
        _
      %p539 = scmp.le.s32.totalorder 2, %s20
      // Predicated region
      $region49: #{tpu_custom_call.1} parent=5 // pred_check
        %p540 = pneg %p539
      $region50: #{tpu_custom_call.1} parent=5 // pred_check_branch
        %542 = sbr.rel (%p540) target = $region52
      $region51: #{tpu_custom_call.1} parent=5 // pred_region
        %s543 = ssub.s32 %s20, 2
        // Predicated region
        $region53: #{tpu_custom_call.1} parent=51 // pred_check
          %p544 = pneg %p155
        $region54: #{tpu_custom_call.1} parent=51 // pred_check_branch
          %546 = sbr.rel (%p544) target = $region56
        $region55: #{tpu_custom_call.1} parent=51 // pred_region
          %s547 = sand.u32 %s140, 1
          %s548 = scalar_lea.sflag [#allocation4], %s547
          %s549 = sand.u32 %s140, 1
          %s550 = smul.addr %s549, 2
          %s551 = scalar_lea.vmem [#allocation5], %s550
          %552 = dma.done %s548, 32
        $region56: #{tpu_custom_call.1} parent=51 // pred_fallthru
          _
        // Predicated region
        $region57: #{tpu_custom_call.1} parent=51 // pred_check
          %p553 = pneg %p183
        $region58: #{tpu_custom_call.1} parent=51 // pred_check_branch
          %555 = sbr.rel (%p553) target = $region60
        $region59: #{tpu_custom_call.1} parent=51 // pred_region
          %s556 = sand.u32 %s168, 1
          %s557 = scalar_lea.sflag [#allocation7], %s556
          %s558 = sand.u32 %s168, 1
          %s559 = smul.addr %s558, 2
          %s560 = scalar_lea.vmem [#allocation6], %s559
          %561 = dma.done %s557, 32
        $region60: #{tpu_custom_call.1} parent=51 // pred_fallthru
          _
      $region52: #{tpu_custom_call.1} parent=5 // pred_fallthru
        _
    $region6: #{tpu_custom_call.1} parent=1 // loop_footer
      %s24 = sadd.s32 1, %s20
    $region7: #{tpu_custom_call.1} parent=1 // loop_footer_branch
      %19 = sbr.rel target = $region3
    $region8: #{tpu_custom_call.1} parent=1 // loop_exit
      _
    %562 = vsyncpa [#allocation3], 1
    %s563 = scalar_lea.sflag [#allocation3], 1
    %564 = vsyncpa %s563, 1
    %565 = vsyncpa [#allocation4], 1
    %s566 = scalar_lea.sflag [#allocation4], 1
    %567 = vsyncpa %s566, 1
    %568 = vsyncpa [#allocation7], 1
    %s569 = scalar_lea.sflag [#allocation7], 1
    %570 = vsyncpa %s569, 1

</llo_original>
